<compile_context>
chip_gen: v7x
topology: tpu7x:2x2x1
jax: 0.10.0
libtpu: 0.0.40
codegen_flags: <defaults>
</compile_context>

<pallas_src>
import jax
import jax.numpy as jnp
from jax.experimental import pallas as pl
from jax.experimental.pallas import tpu as pltpu


def _normalize_kernel(x_ref, sb_ref, o_ref):
    # Elementwise FMA on a lane-dense (tile_rows, tile_cols) block.
    # sb_ref is (tile_rows, 2) f32: column 0 = 1/std, column 1 = -mean/std.
    x = x_ref[...].astype(jnp.float32)          # cast folded into the kernel
    sb = sb_ref[...]
    scale = sb[:, 0:1]                          # (tile_rows, 1), broadcasts over lanes
    bias = sb[:, 1:2]
    o_ref[...] = (x * scale + bias).astype(o_ref.dtype)


def _sublane_quantum(dtype) -> int:
    """Native sublane packing quantum: 8 for 32-bit, 16 for 16-bit, 32 for 8-bit."""
    bits = jnp.dtype(dtype).itemsize * 8
    return max(8, 256 // bits)


def _pick_rows(R, target, quantum):
    if R <= target:
        return R                                 # full extent is always legal
    target = max((target // quantum) * quantum, quantum)
    for r in range(target, quantum - 1, -quantum):   # prefer a divisor -> no ragged edge
        if R % r == 0:
            return r
    return target


def _pick_cols(L, target):
    if L <= target:
        return L
    target = max((target // 128) * 128, 128)
    for c in range(target, 127, -128):               # prefer a divisor of L (full-lane stores)
        if L % c == 0:
            return c
    return target


def _tile_targets():
    """Generation-aware (rows, cols) tile targets (in f32-element units)."""
    kind = ""
    try:
        kind = jax.devices()[0].device_kind.lower()
    except Exception:  # defensive: fall back to the conservative size
        pass
    if "v6" in kind or "v7" in kind:
        return 512, 2048      # 4 MiB f32 tiles; ~16 MiB pipelined (< 32 MiB scoped VMEM)
    return 512, 1024          # v5e & older: ~2 MiB tiles (< 16 MiB scoped VMEM)


def normalize(x: jax.Array, mean, std, *, out_dtype=None,
              target_rows=None, target_cols=None) -> jax.Array:
    """Per-channel normalization, equivalent to the PyTorch Normalize module.

    x: (N, C, H, W). mean/std: length-C sequences.
    NOTE: PyTorch's Normalize only accepts float tensors; integer inputs here are
    promoted inside the kernel and emitted as `out_dtype` (float32 by default).
    """
    N, C, H, W = x.shape
    in_dtype = x.dtype
    if out_dtype is None:
        out_dtype = in_dtype if jnp.issubdtype(in_dtype, jnp.floating) else jnp.float32
    out_dtype = jnp.dtype(out_dtype)

    mean_c = jnp.asarray(mean, dtype=jnp.float32)
    std_c = jnp.asarray(std, dtype=jnp.float32)
    assert mean_c.shape == (C,) and std_c.shape == (C,), "mean/std must have length C"
    scale_c = 1.0 / std_c                       # (x - m)/s == x*scale + bias
    bias_c = -mean_c * scale_c
    sb_c = jnp.stack([scale_c, bias_c], axis=-1)        # (C, 2)

    # Lane-dense flatten: NCHW is contiguous, so this reshape is free.
    R, L = N * C, H * W
    x2 = x.reshape(R, L)
    sb_rows = jnp.tile(sb_c, (N, 1))                     # row r -> channel r % C

    trg_r, trg_c = _tile_targets()
    if target_rows is not None:
        trg_r = target_rows
    if target_cols is not None:
        trg_c = target_cols

    quantum = max(_sublane_quantum(in_dtype), _sublane_quantum(out_dtype))
    tr = _pick_rows(R, trg_r, quantum)
    tc = _pick_cols(L, trg_c)
    grid = (pl.cdiv(R, tr), pl.cdiv(L, tc))

    out2 = pl.pallas_call(
        _normalize_kernel,
        out_shape=jax.ShapeDtypeStruct((R, L), out_dtype),
        grid=grid,
        in_specs=[
            pl.BlockSpec((tr, tc), lambda i, j: (i, j)),   # x tile, original dtype
            pl.BlockSpec((tr, 2), lambda i, j: (i, 0)),    # packed per-row [scale, bias]
        ],
        out_specs=pl.BlockSpec((tr, tc), lambda i, j: (i, j)),
        compiler_params=pltpu.CompilerParams(
            dimension_semantics=("parallel", "parallel"),
        ),
    )(x2, sb_rows)

    return out2.reshape(N, C, H, W)


if __name__ == "__main__":
    key = jax.random.PRNGKey(0)
    N, C, H, W = 2, 4, 16, 16

    # Deterministic "parameters" (the PyTorch module takes mean/std in __init__).
    mean = [0.485, 0.456, 0.406, 0.5][:C]
    std = [0.229, 0.224, 0.225, 0.25][:C]
    mean_a = jnp.asarray(mean, jnp.float32)[None, :, None, None]
    std_a = jnp.asarray(std, jnp.float32)[None, :, None, None]

    # Float path (matches the PyTorch module: float in -> same float dtype out).
    x = jax.random.normal(key, (N, C, H, W), dtype=jnp.float32)
    out = jax.block_until_ready(normalize(x, mean, std))
    ref = (x - mean_a) / std_a
    assert out.shape == x.shape and out.dtype == x.dtype
    assert jnp.allclose(out, ref, atol=1e-5, rtol=1e-5), float(jnp.max(jnp.abs(out - ref)))

    # uint8 image path: dtype cast is folded into the kernel, output is float32.
    xi = jax.random.randint(jax.random.PRNGKey(1), (N, C, H, W), 0, 256, dtype=jnp.int32)
    xi = xi.astype(jnp.uint8)
    outi = jax.block_until_ready(normalize(xi, mean, std))
    refi = (xi.astype(jnp.float32) - mean_a) / std_a
    assert outi.dtype == jnp.float32
    assert jnp.allclose(outi, refi, atol=1e-4, rtol=1e-5), float(jnp.max(jnp.abs(outi - refi)))

    print("KERNEL_OK")
</pallas_src>

<mosaic_0001>
module attributes {stable_mosaic.version = 11 : i64} {
  func.func @_normalize_kernel(%arg0: i32, %arg1: i32, %arg2: memref<8x256xf32, #tpu.memory_space<vmem>>, %arg3: memref<8x2xf32, #tpu.memory_space<vmem>>, %arg4: memref<8x256xf32, #tpu.memory_space<vmem>>) attributes {dimension_semantics = [#tpu.dimension_semantics<parallel>, #tpu.dimension_semantics<parallel>], iteration_bounds = array<i64: 1, 1>, scalar_prefetch = 0 : i64, scratch_operands = 0 : i64, tpu.core_type = #tpu.core_type<tc>, window_params = [{transform_indices = @transform_0, window_bounds = array<i64: 8, 256>}, {transform_indices = @transform_1, window_bounds = array<i64: 8, 2>}, {transform_indices = @transform_2, window_bounds = array<i64: 8, 256>}]} {
    %c0 = arith.constant 0 : index
    %c0_0 = arith.constant 0 : index
    %0 = vector.load %arg2[%c0, %c0_0] : memref<8x256xf32, #tpu.memory_space<vmem>>, vector<8x256xf32>
    %c0_1 = arith.constant 0 : index
    %c0_2 = arith.constant 0 : index
    %1 = vector.load %arg3[%c0_1, %c0_2] : memref<8x2xf32, #tpu.memory_space<vmem>>, vector<8x2xf32>
    %2 = vector.extract_strided_slice %1 {offsets = [0, 0], sizes = [8, 1], strides = [1, 1]} : vector<8x2xf32> to vector<8x1xf32>
    %3 = vector.extract_strided_slice %1 {offsets = [0, 1], sizes = [8, 1], strides = [1, 1]} : vector<8x2xf32> to vector<8x1xf32>
    %4 = vector.broadcast %2 : vector<8x1xf32> to vector<8x256xf32>
    %5 = arith.mulf %0, %4 : vector<8x256xf32>
    %6 = vector.broadcast %3 : vector<8x1xf32> to vector<8x256xf32>
    %7 = arith.addf %5, %6 : vector<8x256xf32>
    %c0_3 = arith.constant 0 : index
    %c0_4 = arith.constant 0 : index
    %8 = vector.load %arg4[%c0_3, %c0_4] : memref<8x256xf32, #tpu.memory_space<vmem>>, vector<8x256xf32>
    tpu.vector_store %arg4[%c0_3, %c0_4], %7 {strides = array<i32>} : memref<8x256xf32, #tpu.memory_space<vmem>>, vector<8x256xf32>,
    return
  }
  func.func @transform_0(%arg0: i32, %arg1: i32) -> (i32, i32) {
    %c0_i32 = arith.constant 0 : i32
    return %arg0, %arg1 : i32, i32
  }
  func.func @transform_1(%arg0: i32, %arg1: i32) -> (i32, i32) {
    %c0_i32 = arith.constant 0 : i32
    %c0_i32_0 = arith.constant 0 : i32
    return %arg0, %c0_i32 : i32, i32
  }
  func.func @transform_2(%arg0: i32, %arg1: i32) -> (i32, i32) {
    %c0_i32 = arith.constant 0 : i32
    return %arg0, %arg1 : i32, i32
  }
}

</mosaic_0001>

<llo_original>
// kernel: tpu_custom_call.1
$region0: #{tpu_custom_call.1}
  #allocation0 [shape = 'u32[]', space=smem, size = 0x4, offset = 0x4, fixed_abs, tag = 'smem constant byte address 0x4 - core index']
  #allocation1 [shape = 'u32[144,128]{1,0:T(1,128)}', space=vmem, size = 0x12000, scoped, tag = 'internal scratch']
  %s0 = inlined_call_operand.hbm [shape: f32[8,256], index: 0, kind: input, shape index: {}]
  %s1 = inlined_call_operand.vmem [shape: f32[8,2], index: 1, kind: input, shape index: {}]
  %s2 = inlined_call_operand.hbm [shape: f32[8,256], index: 2, kind: output, shape index: {}]
  %s3 = sld [smem:[#allocation0]]
  $region22: #{tpu_custom_call.1} parent=0
    _
  %s5 = ssub.s32 1, %s3
  %s6 = scalar_select 0, %s5, %s3
  $region1: #{tpu_custom_call.1} parent=0
    #allocation2 [shape = 'u8[8192]{0}', space=vmem, size = 0x2000, scoped, tag = 'input window, operand 0, single buffered']
    #allocation3 [shape = 's32[1]{0}', space=sflag, size = 0x4, scoped, tag = 'scoped memory for tpu_custom_call.1']
    #allocation4 [shape = 's32[1]{0}', space=sflag, size = 0x4, scoped, tag = 'scoped memory for tpu_custom_call.1']
    #allocation5 [shape = 'u8[8192]{0}', space=vmem, size = 0x2000, scoped, tag = 'output window, operand 0, single buffered']
    %7 = vsyncpa [#allocation3], 0
    %8 = vsyncpa [#allocation4], 0
    // Predicated region
    $region2: #{tpu_custom_call.1} parent=1 // pred_check
      _
    $region3: #{tpu_custom_call.1} parent=1 // pred_check_branch
      %10 = sbr.rel (0) target = $region5
    $region4: #{tpu_custom_call.1} parent=1 // pred_region
      %s12 = ssub.s32 256, 256
      %13 = vsyncadd [#allocation3], %s12
      %s15 = sshll.u32 [#allocation2], 4
      %s16 = int_to_ptr.vmem [resolvable:$true] %s15
      %18 = dma.hbm_to_vmem [thread:$0]  %s0, 256, %s16, [#allocation3]
    $region5: #{tpu_custom_call.1} parent=1 // pred_fallthru
      _
    // Predicated region
    $region6: #{tpu_custom_call.1} parent=1 // pred_check
      _
    $region7: #{tpu_custom_call.1} parent=1 // pred_check_branch
      %20 = sbr.rel (0) target = $region9
    $region8: #{tpu_custom_call.1} parent=1 // pred_region
      _
    $region9: #{tpu_custom_call.1} parent=1 // pred_fallthru
      _
    // Predicated region
    $region10: #{tpu_custom_call.1} parent=1 // pred_check
      _
    $region11: #{tpu_custom_call.1} parent=1 // pred_check_branch
      %22 = sbr.rel (0) target = $region13
    $region12: #{tpu_custom_call.1} parent=1 // pred_region
      %23 = dma.done [#allocation3], 256
    $region13: #{tpu_custom_call.1} parent=1 // pred_fallthru
      _
    %v24 = vld [vmem:[#allocation2] sm:$0xff]
    %v25 = vld [vmem:[#allocation2 + $0x8] sm:$0xff]
    %v26 = vld [vmem:[%s1] sm:$0xff]
    %28 = vset.pattern.permute.xlu0 0
    %29 = vperm.xlu0 %28, %v26
    %v30 = vpop.permute.xlu0 %29
    %v32 = vmul.f32 %v24, %v30
    %v33 = vmul.f32 %v25, %v30
    %34 = vset.pattern.permute.xlu0 1
    %35 = vperm.xlu0 %34, %v26
    %v36 = vpop.permute.xlu0 %35
    %v38 = vadd.f32 %v32, %v36
    %v39 = vadd.f32 %v33, %v36
    %40 = vst [vmem:[#allocation5] sm:$0xff] %v38
    %41 = vst [vmem:[#allocation5 + $0x8] sm:$0xff] %v39
    // Predicated region
    $region14: #{tpu_custom_call.1} parent=1 // pred_check
      _
    $region15: #{tpu_custom_call.1} parent=1 // pred_check_branch
      %43 = sbr.rel (0) target = $region17
    $region16: #{tpu_custom_call.1} parent=1 // pred_region
      %s45 = ssub.s32 256, 256
      %46 = vsyncadd [#allocation4], %s45
      %s48 = sshll.u32 [#allocation5], 4
      %s49 = int_to_ptr.vmem [resolvable:$true] %s48
      %51 = dma.vmem_to_hbm [thread:$0]  %s49, 256, %s2, [#allocation4]
    $region17: #{tpu_custom_call.1} parent=1 // pred_fallthru
      _
    // Predicated region
    $region18: #{tpu_custom_call.1} parent=1 // pred_check
      _
    $region19: #{tpu_custom_call.1} parent=1 // pred_check_branch
      %53 = sbr.rel (0) target = $region21
    $region20: #{tpu_custom_call.1} parent=1 // pred_region
      %54 = dma.done [#allocation4], 256
    $region21: #{tpu_custom_call.1} parent=1 // pred_fallthru
      _
    %55 = vsyncpa [#allocation3], 1
    %56 = vsyncpa [#allocation4], 1

</llo_original>
